<compile_context>
chip_gen: v7x
topology: tpu7x:2x2x1
jax: 0.10.0
libtpu: 0.0.40
codegen_flags: <defaults>
</compile_context>

<pallas_src>
import functools

import jax
import jax.numpy as jnp
import numpy as np
from jax.experimental import pallas as pl
from jax.experimental.pallas import tpu as pltpu

EPS = 1e-5


def _stats_kernel(x_ref, w_ref, g_ref, b_ref, ss_ref, sum_ref, sq_ref, *, cin, inv_m):
    """Pass A: conv (VPU) + accumulate per-channel sum / sumsq; finalize to (scale, shift)."""
    t = pl.program_id(0)

    @pl.when(t == 0)
    def _init():
        sum_ref[...] = jnp.zeros_like(sum_ref)
        sq_ref[...] = jnp.zeros_like(sq_ref)

    x = x_ref[...]          # (Cin, TM)  f32
    w = w_ref[...]          # (Cout, Cin)

    # 1x1 conv as Cout x Cin broadcast multiply-adds on the VPU (no MXU for K=4).
    y = w[:, 0:1] * x[0:1, :]
    for i in range(1, cin):
        y = y + w[:, i:i + 1] * x[i:i + 1, :]

    # Single traversal of y: accumulate sum and sum-of-squares (zero-padded M columns
    # contribute exactly zero to both).
    sum_ref[...] += jnp.sum(y, axis=1, keepdims=True)          # (Cout, 1)
    sq_ref[...] += jnp.sum(y * y, axis=1, keepdims=True)       # (Cout, 1)

    @pl.when(t == pl.num_programs(0) - 1)
    def _finalize():
        mean = sum_ref[...] * inv_m
        var = jnp.maximum(sq_ref[...] * inv_m - mean * mean, 0.0)
        scale = g_ref[...] * jax.lax.rsqrt(var + EPS)          # (Cout, 1)
        shift = b_ref[...] - scale * mean                      # (Cout, 1)
        ss_ref[:, 0:1] = scale
        ss_ref[:, 1:2] = shift


def _apply_kernel(x_ref, w_ref, ss_ref, o_ref, *, cin):
    """Pass B: recompute the tiny conv with BN-scale folded into W, add shift, sigmoid."""
    x = x_ref[...]                       # (Cin, TM)
    scale = ss_ref[:, 0:1]               # (Cout, 1)
    shift = ss_ref[:, 1:2]               # (Cout, 1)
    ws = w_ref[...] * scale              # fold BN scale into the 1x1 weights (Cout*Cin mults)
    y = ws[:, 0:1] * x[0:1, :]
    for i in range(1, cin):
        y = y + ws[:, i:i + 1] * x[i:i + 1, :]
    o_ref[...] = jax.nn.sigmoid(y + shift)


def conv11_block(x_nchw, weight, bias, gamma, beta, padding, *, tile_m=512):
    """x_nchw: (N, Cin, H, W); weight: (Cout, Cin); bias/gamma/beta: (Cout,)."""
    # Conv bias is a mathematical no-op under train-mode BatchNorm (absorbed by the mean).
    del bias
    n, cin, h, w = x_nchw.shape
    cout = weight.shape[0]
    p = padding

    # kernel_size=1 with padding p: padded border pixels see only zeros; they are real
    # output pixels and participate in the batch statistics (matches PyTorch).
    x_pad = jnp.pad(x_nchw, ((0, 0), (0, 0), (p, p), (p, p)))
    hp, wp = h + 2 * p, w + 2 * p
    m_real = n * hp * wp

    # Channels-major lane-dense layout: (Cin, M).  Pad M to a tile multiple with zeros;
    # zero columns contribute nothing to the channel sums.
    # TODO(synk): for very large inputs, read NCHW blocks directly via index_map instead of
    # materializing this transpose in HBM.
    x_cm = jnp.transpose(x_pad, (1, 0, 2, 3)).reshape(cin, m_real)
    m_pad = ((m_real + tile_m - 1) // tile_m) * tile_m
    x_cm = jnp.pad(x_cm, ((0, 0), (0, m_pad - m_real))).astype(jnp.float32)
    num_tiles = m_pad // tile_m

    w_f = weight.reshape(cout, cin).astype(jnp.float32)
    g2 = gamma.reshape(cout, 1).astype(jnp.float32)
    b2 = beta.reshape(cout, 1).astype(jnp.float32)

    # ---------------- Pass A: statistics ----------------
    stats_kernel = functools.partial(_stats_kernel, cin=cin, inv_m=float(1.0 / m_real))
    scale_shift = pl.pallas_call(
        stats_kernel,
        out_shape=jax.ShapeDtypeStruct((cout, 2), jnp.float32),
        grid_spec=pltpu.PrefetchScalarGridSpec(
            num_scalar_prefetch=0,
            grid=(num_tiles,),
            in_specs=[
                pl.BlockSpec((cin, tile_m), lambda t: (0, t)),
                pl.BlockSpec((cout, cin), lambda t: (0, 0)),
                pl.BlockSpec((cout, 1), lambda t: (0, 0)),
                pl.BlockSpec((cout, 1), lambda t: (0, 0)),
            ],
            out_specs=pl.BlockSpec((cout, 2), lambda t: (0, 0)),
            scratch_shapes=[
                pltpu.VMEM((cout, 1), jnp.float32),   # per-channel sum
                pltpu.VMEM((cout, 1), jnp.float32),   # per-channel sum of squares
            ],
        ),
        compiler_params=pltpu.CompilerParams(dimension_semantics=("arbitrary",)),
        cost_estimate=pl.CostEstimate(
            flops=int(4 * m_pad * cin * cout),
            transcendentals=int(cout),
            bytes_accessed=int(4 * (cin * m_pad + cout * cin + 4 * cout)),
        ),
    )(x_cm, w_f, g2, b2)

    # ---------------- Pass B: normalize + sigmoid ----------------
    apply_kernel = functools.partial(_apply_kernel, cin=cin)
    out_cm = pl.pallas_call(
        apply_kernel,
        out_shape=jax.ShapeDtypeStruct((cout, m_pad), jnp.float32),
        grid_spec=pltpu.PrefetchScalarGridSpec(
            num_scalar_prefetch=0,
            grid=(num_tiles,),
            in_specs=[
                pl.BlockSpec((cin, tile_m), lambda t: (0, t)),
                pl.BlockSpec((cout, cin), lambda t: (0, 0)),
                pl.BlockSpec((cout, 2), lambda t: (0, 0)),
            ],
            out_specs=pl.BlockSpec((cout, tile_m), lambda t: (0, t)),
        ),
        compiler_params=pltpu.CompilerParams(dimension_semantics=("parallel",)),
        cost_estimate=pl.CostEstimate(
            flops=int(2 * m_pad * cin * cout + 2 * m_pad * cout),
            transcendentals=int(m_pad * cout),
            bytes_accessed=int(4 * (cin * m_pad + cout * m_pad)),
        ),
    )(x_cm, w_f, scale_shift)

    # (Cout, M) -> NCHW, dropping the M padding.
    out = out_cm[:, :m_real].reshape(cout, n, hp, wp).transpose(1, 0, 2, 3)
    return out


def _reference(x_nchw, weight, bias, gamma, beta, padding):
    """Pure-JAX reference with the original module's semantics (bias included)."""
    p = padding
    x_pad = jnp.pad(x_nchw, ((0, 0), (0, 0), (p, p), (p, p)))
    y = jnp.einsum("nchw,oc->nohw", x_pad, weight) + bias[None, :, None, None]
    mean = jnp.mean(y, axis=(0, 2, 3), keepdims=True)
    var = jnp.mean((y - mean) ** 2, axis=(0, 2, 3), keepdims=True)
    y_hat = (y - mean) / jnp.sqrt(var + EPS)
    return jax.nn.sigmoid(gamma[None, :, None, None] * y_hat + beta[None, :, None, None])


if __name__ == "__main__":
    # Small shapes consistent with the module.
    N, Cin, H, W = 2, 4, 16, 16
    Cout = 8
    padding = 1

    key = jax.random.PRNGKey(0)
    kx, kw, kb, kg, kbe = jax.random.split(key, 5)

    x = jax.random.normal(kx, (N, Cin, H, W), dtype=jnp.float32)

    # Conv2d weight (Cout, Cin, 1, 1) squeezed to (Cout, Cin) since k=1.
    weight = jax.random.normal(kw, (Cout, Cin), dtype=jnp.float32) * 0.1
    bias = jax.random.normal(kb, (Cout,), dtype=jnp.float32) * 0.05
    # Non-trivial BN affine to exercise the folded scale/shift path.
    gamma = 1.0 + 0.3 * jax.random.normal(kg, (Cout,), dtype=jnp.float32)
    beta = 0.2 * jax.random.normal(kbe, (Cout,), dtype=jnp.float32)

    out = conv11_block(x, weight, bias, gamma, beta, padding)
    out = jax.block_until_ready(out)

    ref = jax.block_until_ready(_reference(x, weight, bias, gamma, beta, padding))

    assert out.shape == (N, Cout, H + 2 * padding, W + 2 * padding), out.shape
    np.testing.assert_allclose(np.asarray(out), np.asarray(ref), rtol=1e-4, atol=1e-5)

    print("KERNEL_OK")
</pallas_src>

<mosaic_0001>
module attributes {stable_mosaic.version = 11 : i64} {
  func.func @_stats_kernel(%arg0: i32, %arg1: memref<4x512xf32, #tpu.memory_space<vmem>>, %arg2: memref<8x4xf32, #tpu.memory_space<vmem>>, %arg3: memref<8x1xf32, #tpu.memory_space<vmem>>, %arg4: memref<8x1xf32, #tpu.memory_space<vmem>>, %arg5: memref<8x2xf32, #tpu.memory_space<vmem>>, %arg6: memref<8x1xf32, #tpu.memory_space<vmem>>, %arg7: memref<8x1xf32, #tpu.memory_space<vmem>>) attributes {dimension_semantics = [#tpu.dimension_semantics<arbitrary>], iteration_bounds = array<i64: 2>, scalar_prefetch = 0 : i64, scratch_operands = 2 : i64, tpu.core_type = #tpu.core_type<tc>, window_params = [{transform_indices = @transform_0, window_bounds = array<i64: 4, 512>}, {pipeline_mode = #tpu.pipeline_mode<synchronous>, transform_indices = @transform_1, window_bounds = array<i64: 8, 4>}, {pipeline_mode = #tpu.pipeline_mode<synchronous>, transform_indices = @transform_2, window_bounds = array<i64: 8, 1>}, {pipeline_mode = #tpu.pipeline_mode<synchronous>, transform_indices = @transform_3, window_bounds = array<i64: 8, 1>}, {pipeline_mode = #tpu.pipeline_mode<synchronous>, transform_indices = @transform_4, window_bounds = array<i64: 8, 2>}]} {
    %c0_i32 = arith.constant 0 : i32
    %0 = arith.cmpi eq, %arg0, %c0_i32 : i32
    %1 = arith.extui %0 : i1 to i32
    %c0_i32_0 = arith.constant 0 : i32
    %2 = arith.cmpi ne, %1, %c0_i32_0 : i32
    scf.if %2 {
      %cst_14 = arith.constant 0.000000e+00 : f32
      %42 = vector.broadcast %cst_14 : f32 to vector<8x1xf32>
      %c0_15 = arith.constant 0 : index
      %c0_16 = arith.constant 0 : index
      %43 = vector.load %arg6[%c0_15, %c0_16] : memref<8x1xf32, #tpu.memory_space<vmem>>, vector<8x1xf32>
      tpu.vector_store %arg6[%c0_15, %c0_16], %42 {strides = array<i32>} : memref<8x1xf32, #tpu.memory_space<vmem>>, vector<8x1xf32>,
      %cst_17 = arith.constant 0.000000e+00 : f32
      %44 = vector.broadcast %cst_17 : f32 to vector<8x1xf32>
      %c0_18 = arith.constant 0 : index
      %c0_19 = arith.constant 0 : index
      %45 = vector.load %arg7[%c0_18, %c0_19] : memref<8x1xf32, #tpu.memory_space<vmem>>, vector<8x1xf32>
      tpu.vector_store %arg7[%c0_18, %c0_19], %44 {strides = array<i32>} : memref<8x1xf32, #tpu.memory_space<vmem>>, vector<8x1xf32>,
    } else {
    }
    %c0 = arith.constant 0 : index
    %c0_1 = arith.constant 0 : index
    %3 = vector.load %arg1[%c0, %c0_1] : memref<4x512xf32, #tpu.memory_space<vmem>>, vector<4x512xf32>
    %c0_2 = arith.constant 0 : index
    %c0_3 = arith.constant 0 : index
    %4 = vector.load %arg2[%c0_2, %c0_3] : memref<8x4xf32, #tpu.memory_space<vmem>>, vector<8x4xf32>
    %5 = vector.extract_strided_slice %4 {offsets = [0, 0], sizes = [8, 1], strides = [1, 1]} : vector<8x4xf32> to vector<8x1xf32>
    %6 = vector.extract_strided_slice %3 {offsets = [0, 0], sizes = [1, 512], strides = [1, 1]} : vector<4x512xf32> to vector<1x512xf32>
    %7 = vector.broadcast %5 : vector<8x1xf32> to vector<8x512xf32>
    %8 = vector.broadcast %6 : vector<1x512xf32> to vector<8x512xf32>
    %9 = arith.mulf %7, %8 : vector<8x512xf32>
    %10 = vector.extract_strided_slice %4 {offsets = [0, 1], sizes = [8, 1], strides = [1, 1]} : vector<8x4xf32> to vector<8x1xf32>
    %11 = vector.extract_strided_slice %3 {offsets = [1, 0], sizes = [1, 512], strides = [1, 1]} : vector<4x512xf32> to vector<1x512xf32>
    %12 = vector.broadcast %10 : vector<8x1xf32> to vector<8x512xf32>
    %13 = vector.broadcast %11 : vector<1x512xf32> to vector<8x512xf32>
    %14 = arith.mulf %12, %13 : vector<8x512xf32>
    %15 = arith.addf %9, %14 : vector<8x512xf32>
    %16 = vector.extract_strided_slice %4 {offsets = [0, 2], sizes = [8, 1], strides = [1, 1]} : vector<8x4xf32> to vector<8x1xf32>
    %17 = vector.extract_strided_slice %3 {offsets = [2, 0], sizes = [1, 512], strides = [1, 1]} : vector<4x512xf32> to vector<1x512xf32>
    %18 = vector.broadcast %16 : vector<8x1xf32> to vector<8x512xf32>
    %19 = vector.broadcast %17 : vector<1x512xf32> to vector<8x512xf32>
    %20 = arith.mulf %18, %19 : vector<8x512xf32>
    %21 = arith.addf %15, %20 : vector<8x512xf32>
    %22 = vector.extract_strided_slice %4 {offsets = [0, 3], sizes = [8, 1], strides = [1, 1]} : vector<8x4xf32> to vector<8x1xf32>
    %23 = vector.extract_strided_slice %3 {offsets = [3, 0], sizes = [1, 512], strides = [1, 1]} : vector<4x512xf32> to vector<1x512xf32>
    %24 = vector.broadcast %22 : vector<8x1xf32> to vector<8x512xf32>
    %25 = vector.broadcast %23 : vector<1x512xf32> to vector<8x512xf32>
    %26 = arith.mulf %24, %25 : vector<8x512xf32>
    %27 = arith.addf %21, %26 : vector<8x512xf32>
    %c0_4 = arith.constant 0 : index
    %c0_5 = arith.constant 0 : index
    %28 = vector.load %arg6[%c0_4, %c0_5] : memref<8x1xf32, #tpu.memory_space<vmem>>, vector<8x1xf32>
    %cst = arith.constant dense<0.000000e+00> : vector<8xf32>
    %29 = vector.multi_reduction <add>, %27, %cst [1] : vector<8x512xf32> to vector<8xf32>
    %30 = vector.shape_cast %29 : vector<8xf32> to vector<8x1xf32>
    %31 = arith.addf %28, %30 : vector<8x1xf32>
    %c0_6 = arith.constant 0 : index
    %c0_7 = arith.constant 0 : index
    %32 = vector.load %arg6[%c0_6, %c0_7] : memref<8x1xf32, #tpu.memory_space<vmem>>, vector<8x1xf32>
    tpu.vector_store %arg6[%c0_6, %c0_7], %31 {strides = array<i32>} : memref<8x1xf32, #tpu.memory_space<vmem>>, vector<8x1xf32>,
    %c0_8 = arith.constant 0 : index
    %c0_9 = arith.constant 0 : index
    %33 = vector.load %arg7[%c0_8, %c0_9] : memref<8x1xf32, #tpu.memory_space<vmem>>, vector<8x1xf32>
    %34 = arith.mulf %27, %27 : vector<8x512xf32>
    %cst_10 = arith.constant dense<0.000000e+00> : vector<8xf32>
    %35 = vector.multi_reduction <add>, %34, %cst_10 [1] : vector<8x512xf32> to vector<8xf32>
    %36 = vector.shape_cast %35 : vector<8xf32> to vector<8x1xf32>
    %37 = arith.addf %33, %36 : vector<8x1xf32>
    %c0_11 = arith.constant 0 : index
    %c0_12 = arith.constant 0 : index
    %38 = vector.load %arg7[%c0_11, %c0_12] : memref<8x1xf32, #tpu.memory_space<vmem>>, vector<8x1xf32>
    tpu.vector_store %arg7[%c0_11, %c0_12], %37 {strides = array<i32>} : memref<8x1xf32, #tpu.memory_space<vmem>>, vector<8x1xf32>,
    %c1_i32 = arith.constant 1 : i32
    %39 = arith.cmpi eq, %arg0, %c1_i32 : i32
    %40 = arith.extui %39 : i1 to i32
    %c0_i32_13 = arith.constant 0 : i32
    %41 = arith.cmpi ne, %40, %c0_i32_13 : i32
    scf.if %41 {
      %c0_14 = arith.constant 0 : index
      %c0_15 = arith.constant 0 : index
      %42 = vector.load %arg6[%c0_14, %c0_15] : memref<8x1xf32, #tpu.memory_space<vmem>>, vector<8x1xf32>
      %cst_16 = arith.constant 0.00154320989 : f32
      %43 = vector.broadcast %cst_16 : f32 to vector<8x1xf32>
      %44 = arith.mulf %42, %43 : vector<8x1xf32>
      %c0_17 = arith.constant 0 : index
      %c0_18 = arith.constant 0 : index
      %45 = vector.load %arg7[%c0_17, %c0_18] : memref<8x1xf32, #tpu.memory_space<vmem>>, vector<8x1xf32>
      %cst_19 = arith.constant 0.00154320989 : f32
      %46 = vector.broadcast %cst_19 : f32 to vector<8x1xf32>
      %47 = arith.mulf %45, %46 : vector<8x1xf32>
      %48 = arith.mulf %44, %44 : vector<8x1xf32>
      %49 = arith.subf %47, %48 : vector<8x1xf32>
      %cst_20 = arith.constant 0.000000e+00 : f32
      %50 = vector.broadcast %cst_20 : f32 to vector<8x1xf32>
      %51 = arith.maximumf %49, %50 : vector<8x1xf32>
      %c0_21 = arith.constant 0 : index
      %c0_22 = arith.constant 0 : index
      %52 = vector.load %arg3[%c0_21, %c0_22] : memref<8x1xf32, #tpu.memory_space<vmem>>, vector<8x1xf32>
      %cst_23 = arith.constant 9.99999974E-6 : f32
      %53 = vector.broadcast %cst_23 : f32 to vector<8x1xf32>
      %54 = arith.addf %51, %53 : vector<8x1xf32>
      %55 = math.rsqrt %54 : vector<8x1xf32>
      %56 = arith.mulf %52, %55 : vector<8x1xf32>
      %c0_24 = arith.constant 0 : index
      %c0_25 = arith.constant 0 : index
      %57 = vector.load %arg4[%c0_24, %c0_25] : memref<8x1xf32, #tpu.memory_space<vmem>>, vector<8x1xf32>
      %58 = arith.mulf %56, %44 : vector<8x1xf32>
      %59 = arith.subf %57, %58 : vector<8x1xf32>
      %c0_26 = arith.constant 0 : index
      %c0_27 = arith.constant 0 : index
      %60 = vector.load %arg5[%c0_26, %c0_27] : memref<8x2xf32, #tpu.memory_space<vmem>>, vector<8x1xf32>
      tpu.vector_store %arg5[%c0_26, %c0_27], %56 {strides = array<i32>} : memref<8x2xf32, #tpu.memory_space<vmem>>, vector<8x1xf32>,
      %c0_28 = arith.constant 0 : index
      %c1 = arith.constant 1 : index
      %61 = vector.load %arg5[%c0_28, %c1] : memref<8x2xf32, #tpu.memory_space<vmem>>, vector<8x1xf32>
      tpu.vector_store %arg5[%c0_28, %c1], %59 {strides = array<i32>} : memref<8x2xf32, #tpu.memory_space<vmem>>, vector<8x1xf32>,
    } else {
    }
    return
  }
  func.func @transform_0(%arg0: i32) -> (i32, i32) {
    %c0_i32 = arith.constant 0 : i32
    %c0_i32_0 = arith.constant 0 : i32
    return %c0_i32, %arg0 : i32, i32
  }
  func.func @transform_1(%arg0: i32) -> (i32, i32) {
    %c0_i32 = arith.constant 0 : i32
    %c0_i32_0 = arith.constant 0 : i32
    %c0_i32_1 = arith.constant 0 : i32
    return %c0_i32, %c0_i32_0 : i32, i32
  }
  func.func @transform_2(%arg0: i32) -> (i32, i32) {
    %c0_i32 = arith.constant 0 : i32
    %c0_i32_0 = arith.constant 0 : i32
    %c0_i32_1 = arith.constant 0 : i32
    return %c0_i32, %c0_i32_0 : i32, i32
  }
  func.func @transform_3(%arg0: i32) -> (i32, i32) {
    %c0_i32 = arith.constant 0 : i32
    %c0_i32_0 = arith.constant 0 : i32
    %c0_i32_1 = arith.constant 0 : i32
    return %c0_i32, %c0_i32_0 : i32, i32
  }
  func.func @transform_4(%arg0: i32) -> (i32, i32) {
    %c0_i32 = arith.constant 0 : i32
    %c0_i32_0 = arith.constant 0 : i32
    %c0_i32_1 = arith.constant 0 : i32
    return %c0_i32, %c0_i32_0 : i32, i32
  }
}

</mosaic_0001>

<llo_original>
// kernel: tpu_custom_call.1
$region0: #{tpu_custom_call.1}
  #allocation0 [shape = 'u32[]', space=smem, size = 0x4, offset = 0x4, fixed_abs, tag = 'smem constant byte address 0x4 - core index']
  #allocation1 [shape = 'u32[144,128]{1,0:T(1,128)}', space=vmem, size = 0x12000, scoped, tag = 'internal scratch']
  #allocation2 [shape = 'f32[8,1]{1,0:T(8,128)}', space=vmem, size = 0x1000, scoped, tag = 'scratch operand']
  #allocation3 [shape = 'f32[8,1]{1,0:T(8,128)}', space=vmem, size = 0x1000, scoped, tag = 'scratch operand']
  %s0 = inlined_call_operand.hbm [shape: f32[4,1024], index: 0, kind: input, shape index: {}]
  %s1 = inlined_call_operand.vmem [shape: f32[8,4], index: 1, kind: input, shape index: {}]
  %s2 = inlined_call_operand.vmem [shape: f32[8,1], index: 2, kind: input, shape index: {}]
  %s3 = inlined_call_operand.vmem [shape: f32[8,1], index: 3, kind: input, shape index: {}]
  %s4 = inlined_call_operand.vmem [shape: f32[8,2], index: 4, kind: output, shape index: {}]
  %s5 = sld [smem:[#allocation0]]
  $region61: #{tpu_custom_call.1} parent=0
    _
  %s7 = ssub.s32 1, %s5
  %s8 = scalar_select 0, %s7, %s5
  $region1: #{tpu_custom_call.1} parent=0
    #allocation4 [shape = 'u8[16384]{0}', space=vmem, size = 0x4000, scoped, tag = 'input window, operand 0']
    #allocation5 [shape = 's32[2]{0}', space=sflag, size = 0x8, scoped, tag = 'scoped memory for tpu_custom_call.1']
    %9 = vsyncpa [#allocation5], 0
    %s10 = scalar_lea.sflag [#allocation5], 1
    %11 = vsyncpa %s10, 0
    loop: start=0, step=1, limit=4
    $region2: #{tpu_custom_call.1} parent=1 // loop_pre_header
      _
    $region3: #{tpu_custom_call.1} parent=1 // loop_header
      %s13 = sphi 0, %s17
      %p14 = scmp.ge.s32.totalorder %s13, 4
      %s23 = sphi 0, %s25
      %s26 = sphi 0, %s23
      %s27 = sphi 0, %s26
      %s43 = sphi 0, %s27
      %s47 = sphi 0, %s47
      %s49 = sphi 0, %s47
      %s50 = sphi 0, %s49
      %s64 = sphi 0, %s50
      %s68 = sphi 0, %s68
      %s70 = sphi 0, %s68
      %s71 = sphi 0, %s70
      %s85 = sphi 0, %s71
      %s89 = sphi 0, %s89
      %s91 = sphi 0, %s89
      %s92 = sphi 0, %s91
      %s106 = sphi 0, %s92
      %s110 = sphi 0, %s110
      %s112 = sphi 0, %s110
      %s113 = sphi 0, %s112
      %s127 = sphi 0, %s113
    $region4: #{tpu_custom_call.1} parent=1 // loop_header_branch
      %16 = sbr.rel (%p14) target = $region8
    $region5: #{tpu_custom_call.1} parent=1 // loop_body
      %s18 = ssub.s32 %s13, 1
      %s19 = ssub.s32 %s13, 2
      %s20 = sadd.s32 %s13, 1
      %s21 = ssub.s32 %s13, %s20
      %p22 = scmp.eq.s32.totalorder %s21, 0
      %s24 = sadd.s32 %s23, 1
      %s25 = scalar_select %p22, %s23, %s24
      %p28 = pneg %p22
      %p29 = scmp.eq.s32.totalorder %s13, 1
      %p30 = por %p28, %p29
      %p31 = scmp.ne.s32.totalorder %s23, %s26
      %p32 = scmp.eq.s32.totalorder %s13, 0
      %p33 = por %p31, %p32
      %p34 = scmp.ne.s32.totalorder %s23, %s26
      %p35 = scmp.eq.s32.totalorder %s18, 1
      %p36 = por %p34, %p35
      %p37 = scmp.ne.s32.totalorder %s26, %s27
      %p38 = scmp.eq.s32.totalorder %s18, 0
      %p39 = por %p37, %p38
      %p40 = scmp.ne.s32.totalorder %s26, %s27
      %p41 = scmp.eq.s32.totalorder %s19, 1
      %p42 = por %p40, %p41
      %p44 = scmp.ne.s32.totalorder %s27, %s43
      %p45 = scmp.eq.s32.totalorder %s19, 0
      %p46 = por %p44, %p45
      %s48 = sadd.s32 %s47, 1
      %p51 = scmp.eq.s32.totalorder %s13, 1
      %p52 = scmp.ne.s32.totalorder %s47, %s49
      %p53 = scmp.eq.s32.totalorder %s13, 0
      %p54 = por %p52, %p53
      %p55 = scmp.ne.s32.totalorder %s47, %s49
      %p56 = scmp.eq.s32.totalorder %s18, 1
      %p57 = por %p55, %p56
      %p58 = scmp.ne.s32.totalorder %s49, %s50
      %p59 = scmp.eq.s32.totalorder %s18, 0
      %p60 = por %p58, %p59
      %p61 = scmp.ne.s32.totalorder %s49, %s50
      %p62 = scmp.eq.s32.totalorder %s19, 1
      %p63 = por %p61, %p62
      %p65 = scmp.ne.s32.totalorder %s50, %s64
      %p66 = scmp.eq.s32.totalorder %s19, 0
      %p67 = por %p65, %p66
      %s69 = sadd.s32 %s68, 1
      %p72 = scmp.eq.s32.totalorder %s13, 1
      %p73 = scmp.ne.s32.totalorder %s68, %s70
      %p74 = scmp.eq.s32.totalorder %s13, 0
      %p75 = por %p73, %p74
      %p76 = scmp.ne.s32.totalorder %s68, %s70
      %p77 = scmp.eq.s32.totalorder %s18, 1
      %p78 = por %p76, %p77
      %p79 = scmp.ne.s32.totalorder %s70, %s71
      %p80 = scmp.eq.s32.totalorder %s18, 0
      %p81 = por %p79, %p80
      %p82 = scmp.ne.s32.totalorder %s70, %s71
      %p83 = scmp.eq.s32.totalorder %s19, 1
      %p84 = por %p82, %p83
      %p86 = scmp.ne.s32.totalorder %s71, %s85
      %p87 = scmp.eq.s32.totalorder %s19, 0
      %p88 = por %p86, %p87
      %s90 = sadd.s32 %s89, 1
      %p93 = scmp.eq.s32.totalorder %s13, 1
      %p94 = scmp.ne.s32.totalorder %s89, %s91
      %p95 = scmp.eq.s32.totalorder %s13, 0
      %p96 = por %p94, %p95
      %p97 = scmp.ne.s32.totalorder %s89, %s91
      %p98 = scmp.eq.s32.totalorder %s18, 1
      %p99 = por %p97, %p98
      %p100 = scmp.ne.s32.totalorder %s91, %s92
      %p101 = scmp.eq.s32.totalorder %s18, 0
      %p102 = por %p100, %p101
      %p103 = scmp.ne.s32.totalorder %s91, %s92
      %p104 = scmp.eq.s32.totalorder %s19, 1
      %p105 = por %p103, %p104
      %p107 = scmp.ne.s32.totalorder %s92, %s106
      %p108 = scmp.eq.s32.totalorder %s19, 0
      %p109 = por %p107, %p108
      %s111 = sadd.s32 %s110, 1
      %p114 = scmp.eq.s32.totalorder %s13, 1
      %p115 = scmp.ne.s32.totalorder %s110, %s112
      %p116 = scmp.eq.s32.totalorder %s13, 0
      %p117 = por %p115, %p116
      %p118 = scmp.ne.s32.totalorder %s110, %s112
      %p119 = scmp.eq.s32.totalorder %s18, 1
      %p120 = por %p118, %p119
      %p121 = scmp.ne.s32.totalorder %s112, %s113
      %p122 = scmp.eq.s32.totalorder %s18, 0
      %p123 = por %p121, %p122
      %p124 = scmp.ne.s32.totalorder %s112, %s113
      %p125 = scmp.eq.s32.totalorder %s19, 1
      %p126 = por %p124, %p125
      %p128 = scmp.ne.s32.totalorder %s113, %s127
      %p129 = scmp.eq.s32.totalorder %s19, 0
      %p130 = por %p128, %p129
      %p131 = scmp.le.s32.totalorder 1, %s13
      %p132 = scmp.lt.s32.totalorder %s13, 3
      %p133 = pnand %p131, %p132
      %p134 = pneg %p133
      // Predicated region
      $region9: #{tpu_custom_call.1} parent=5 // pred_check
        _
      $region10: #{tpu_custom_call.1} parent=5 // pred_check_branch
        %136 = sbr.rel (%p133) target = $region12
      $region11: #{tpu_custom_call.1} parent=5 // pred_region
        %s137 = ssub.s32 %s13, 1
        // Predicated region
        $region13: #{tpu_custom_call.1} parent=11 // pred_check
          %p138 = pneg %p60
        $region14: #{tpu_custom_call.1} parent=11 // pred_check_branch
          %140 = sbr.rel (%p138) target = $region16
        $region15: #{tpu_custom_call.1} parent=11 // pred_region
          _
        $region16: #{tpu_custom_call.1} parent=11 // pred_fallthru
          _
        // Predicated region
        $region17: #{tpu_custom_call.1} parent=11 // pred_check
          %p141 = pneg %p81
        $region18: #{tpu_custom_call.1} parent=11 // pred_check_branch
          %143 = sbr.rel (%p141) target = $region20
        $region19: #{tpu_custom_call.1} parent=11 // pred_region
          _
        $region20: #{tpu_custom_call.1} parent=11 // pred_fallthru
          _
        // Predicated region
        $region21: #{tpu_custom_call.1} parent=11 // pred_check
          %p144 = pneg %p102
        $region22: #{tpu_custom_call.1} parent=11 // pred_check_branch
          %146 = sbr.rel (%p144) target = $region24
        $region23: #{tpu_custom_call.1} parent=11 // pred_region
          _
        $region24: #{tpu_custom_call.1} parent=11 // pred_fallthru
          _
      $region12: #{tpu_custom_call.1} parent=5 // pred_fallthru
        _
      %p147 = scmp.lt.s32.totalorder %s13, 2
      // Predicated region
      $region25: #{tpu_custom_call.1} parent=5 // pred_check
        %p148 = pneg %p147
      $region26: #{tpu_custom_call.1} parent=5 // pred_check_branch
        %150 = sbr.rel (%p148) target = $region28
      $region27: #{tpu_custom_call.1} parent=5 // pred_region
        // Predicated region
        $region29: #{tpu_custom_call.1} parent=27 // pred_check
          %p151 = pneg %p33
        $region30: #{tpu_custom_call.1} parent=27 // pred_check_branch
          %153 = sbr.rel (%p151) target = $region32
        $region31: #{tpu_custom_call.1} parent=27 // pred_region
          %s154 = sand.u32 %s23, 1
          %s155 = scalar_lea.sflag [#allocation5], %s154
          %s156 = sand.u32 %s23, 1
          %s157 = smul.addr %s156, 16
          %s158 = scalar_lea.vmem [#allocation4], %s157
          %s159 = smul.u32 4, %s13
          %s161 = ssub.s32 256, 256
          %162 = vsyncadd %s155, %s161
          %s163 = smul.addr %s159, 64
          %s164 = scalar_lea.hbm %s0, %s163
          %s166 = sshll.u32 %s158, 4
          %s167 = int_to_ptr.vmem [resolvable:$true] %s166
          %169 = dma.hbm_to_vmem [thread:$0]  %s164, 256, %s167, %s155
        $region32: #{tpu_custom_call.1} parent=27 // pred_fallthru
          _
      $region28: #{tpu_custom_call.1} parent=5 // pred_fallthru
        _
      %p170 = scmp.le.s32.totalorder 1, %s13
      %p171 = scmp.lt.s32.totalorder %s13, 3
      %p172 = pnand %p170, %p171
      %p173 = pneg %p172
      // Predicated region
      $region33: #{tpu_custom_call.1} parent=5 // pred_check
        _
      $region34: #{tpu_custom_call.1} parent=5 // pred_check_branch
        %175 = sbr.rel (%p172) target = $region36
      $region35: #{tpu_custom_call.1} parent=5 // pred_region
        %s176 = ssub.s32 %s13, 1
        %s177 = sand.u32 %s26, 1
        %s178 = scalar_lea.sflag [#allocation5], %s177
        %s179 = sand.u32 %s26, 1
        %s180 = smul.addr %s179, 16
        %s181 = scalar_lea.vmem [#allocation4], %s180
        // Predicated region
        $region37: #{tpu_custom_call.1} parent=35 // pred_check
          %p182 = pneg %p39
        $region38: #{tpu_custom_call.1} parent=35 // pred_check_branch
          %184 = sbr.rel (%p182) target = $region40
        $region39: #{tpu_custom_call.1} parent=35 // pred_region
          %185 = dma.done %s178, 256
        $region40: #{tpu_custom_call.1} parent=35 // pred_fallthru
          _
        %s186 = sand.u32 %s26, 1
        %s187 = scalar_lea.sflag [#allocation5], %s186
        %s188 = sand.u32 %s26, 1
        %s189 = smul.addr %s188, 16
        %s190 = scalar_lea.vmem [#allocation4], %s189
        %p191 = pneg %p39
        %p192 = pneg %p36
        %p193 = pneg %p60
        %p194 = pneg %p57
        %p195 = pneg %p81
        %p196 = pneg %p78
        %p197 = pneg %p102
        %p198 = pneg %p99
        %p199 = pneg %p123
        %p200 = pneg %p120
        %s201 = smul.u32 4, %s18
        %p202 = scmp.eq.s32.totalorder %s18, 0
        // Predicated region
        $region41: #{tpu_custom_call.1} parent=35 // pred_check
          %p203 = pneg %p202
        $region42: #{tpu_custom_call.1} parent=35 // pred_check_branch
          %205 = sbr.rel (%p203) target = $region44
        $region43: #{tpu_custom_call.1} parent=35 // pred_region
          %vm206 = vcmask 7168
          %207 = vst.msk [vmem:[#allocation2] sm:$0xff] %vm206, 0.0
          %208 = vst.msk [vmem:[#allocation3] sm:$0xff] %vm206, 0.0
        $region44: #{tpu_custom_call.1} parent=35 // pred_fallthru
          _
        %v209 = vld [vmem:[%s181] sm:$0xff]
        %v210 = vld [vmem:[%s181 + $0x8] sm:$0xff]
        %v211 = vld [vmem:[%s1] sm:$0xff]
        %213 = vset.pattern.permute.xlu0 0
        %214 = vperm.xlu0 %213, %v211
        %v215 = vpop.permute.xlu0 %214
        %v219 = vlaneseq
        %v220 = vshrl.u32 %v219, 7
        %v221 = vsub.s32 0, %v220
        %v222 = vrot.slane %v209, %v221
        %v223 = vlaneseq
        %v224 = vshrl.u32 %v223, 7
        %v225 = vsub.s32 4, %v224
        %v226 = vrot.slane %v209, %v225
        %v227 = vlaneseq
        %v228 = vshrl.u32 %v227, 7
        %v229 = vsub.s32 0, %v228
        %v230 = vrot.slane %v210, %v229
        %v231 = vlaneseq
        %v232 = vshrl.u32 %v231, 7
        %v233 = vsub.s32 4, %v232
        %v234 = vrot.slane %v210, %v233
        %v239 = vlaneseq
        %v240 = vshrl.u32 %v239, 7
        %v241 = vsub.s32 0, %v240
        %v242 = vrot.slane %v222, %v241
        %v243 = vlaneseq
        %v244 = vshrl.u32 %v243, 7
        %v245 = vsub.s32 0, %v244
        %v246 = vrot.slane %v226, %v245
        %v247 = vlaneseq
        %v248 = vshrl.u32 %v247, 7
        %v249 = vsub.s32 0, %v248
        %v250 = vrot.slane %v230, %v249
        %v251 = vlaneseq
        %v252 = vshrl.u32 %v251, 7
        %v253 = vsub.s32 0, %v252
        %v254 = vrot.slane %v234, %v253
        %v255 = vmul.f32 %v215, %v242
        %v256 = vmul.f32 %v215, %v246
        %v257 = vmul.f32 %v215, %v250
        %v258 = vmul.f32 %v215, %v254
        %259 = vset.pattern.permute.xlu0 1
        %260 = vperm.xlu0 %259, %v211
        %v261 = vpop.permute.xlu0 %260
        %v263 = vlaneseq
        %v264 = vshrl.u32 %v263, 7
        %v265 = vsub.s32 1, %v264
        %v266 = vrot.slane %v209, %v265
        %v267 = vlaneseq
        %v268 = vshrl.u32 %v267, 7
        %v269 = vsub.s32 5, %v268
        %v270 = vrot.slane %v209, %v269
        %v271 = vlaneseq
        %v272 = vshrl.u32 %v271, 7
        %v273 = vsub.s32 1, %v272
        %v274 = vrot.slane %v210, %v273
        %v275 = vlaneseq
        %v276 = vshrl.u32 %v275, 7
        %v277 = vsub.s32 5, %v276
        %v278 = vrot.slane %v210, %v277
        %v283 = vlaneseq
        %v284 = vshrl.u32 %v283, 7
        %v285 = vsub.s32 1, %v284
        %v286 = vrot.slane %v266, %v285
        %v287 = vlaneseq
        %v288 = vshrl.u32 %v287, 7
        %v289 = vsub.s32 1, %v288
        %v290 = vrot.slane %v270, %v289
        %v291 = vlaneseq
        %v292 = vshrl.u32 %v291, 7
        %v293 = vsub.s32 1, %v292
        %v294 = vrot.slane %v274, %v293
        %v295 = vlaneseq
        %v296 = vshrl.u32 %v295, 7
        %v297 = vsub.s32 1, %v296
        %v298 = vrot.slane %v278, %v297
        %v299 = vmul.f32 %v261, %v286
        %v300 = vmul.f32 %v261, %v290
        %v301 = vmul.f32 %v261, %v294
        %v302 = vmul.f32 %v261, %v298
        %v303 = vadd.f32 %v255, %v299
        %v304 = vadd.f32 %v256, %v300
        %v305 = vadd.f32 %v257, %v301
        %v306 = vadd.f32 %v258, %v302
        %307 = vset.pattern.permute.xlu0 2
        %308 = vperm.xlu0 %307, %v211
        %v309 = vpop.permute.xlu0 %308
        %v311 = vlaneseq
        %v312 = vshrl.u32 %v311, 7
        %v313 = vsub.s32 2, %v312
        %v314 = vrot.slane %v209, %v313
        %v315 = vlaneseq
        %v316 = vshrl.u32 %v315, 7
        %v317 = vsub.s32 6, %v316
        %v318 = vrot.slane %v209, %v317
        %v319 = vlaneseq
        %v320 = vshrl.u32 %v319, 7
        %v321 = vsub.s32 2, %v320
        %v322 = vrot.slane %v210, %v321
        %v323 = vlaneseq
        %v324 = vshrl.u32 %v323, 7
        %v325 = vsub.s32 6, %v324
        %v326 = vrot.slane %v210, %v325
        %v331 = vlaneseq
        %v332 = vshrl.u32 %v331, 7
        %v333 = vsub.s32 2, %v332
        %v334 = vrot.slane %v314, %v333
        %v335 = vlaneseq
        %v336 = vshrl.u32 %v335, 7
        %v337 = vsub.s32 2, %v336
        %v338 = vrot.slane %v318, %v337
        %v339 = vlaneseq
        %v340 = vshrl.u32 %v339, 7
        %v341 = vsub.s32 2, %v340
        %v342 = vrot.slane %v322, %v341
        %v343 = vlaneseq
        %v344 = vshrl.u32 %v343, 7
        %v345 = vsub.s32 2, %v344
        %v346 = vrot.slane %v326, %v345
        %v347 = vmul.f32 %v309, %v334
        %v348 = vmul.f32 %v309, %v338
        %v349 = vmul.f32 %v309, %v342
        %v350 = vmul.f32 %v309, %v346
        %v351 = vadd.f32 %v303, %v347
        %v352 = vadd.f32 %v304, %v348
        %v353 = vadd.f32 %v305, %v349
        %v354 = vadd.f32 %v306, %v350
        %355 = vset.pattern.permute.xlu0 3
        %356 = vperm.xlu0 %355, %v211
        %v357 = vpop.permute.xlu0 %356
        %v359 = vlaneseq
        %v360 = vshrl.u32 %v359, 7
        %v361 = vsub.s32 3, %v360
        %v362 = vrot.slane %v209, %v361
        %v363 = vlaneseq
        %v364 = vshrl.u32 %v363, 7
        %v365 = vsub.s32 7, %v364
        %v366 = vrot.slane %v209, %v365
        %v367 = vlaneseq
        %v368 = vshrl.u32 %v367, 7
        %v369 = vsub.s32 3, %v368
        %v370 = vrot.slane %v210, %v369
        %v371 = vlaneseq
        %v372 = vshrl.u32 %v371, 7
        %v373 = vsub.s32 7, %v372
        %v374 = vrot.slane %v210, %v373
        %v379 = vlaneseq
        %v380 = vshrl.u32 %v379, 7
        %v381 = vsub.s32 3, %v380
        %v382 = vrot.slane %v362, %v381
        %v383 = vlaneseq
        %v384 = vshrl.u32 %v383, 7
        %v385 = vsub.s32 3, %v384
        %v386 = vrot.slane %v366, %v385
        %v387 = vlaneseq
        %v388 = vshrl.u32 %v387, 7
        %v389 = vsub.s32 3, %v388
        %v390 = vrot.slane %v370, %v389
        %v391 = vlaneseq
        %v392 = vshrl.u32 %v391, 7
        %v393 = vsub.s32 3, %v392
        %v394 = vrot.slane %v374, %v393
        %v395 = vmul.f32 %v357, %v382
        %v396 = vmul.f32 %v357, %v386
        %v397 = vmul.f32 %v357, %v390
        %v398 = vmul.f32 %v357, %v394
        %v399 = vadd.f32 %v351, %v395
        %v400 = vadd.f32 %v352, %v396
        %v401 = vadd.f32 %v353, %v397
        %v402 = vadd.f32 %v354, %v398
        %v403 = vld [vmem:[#allocation2] sm:$0xff]
        %v404 = vadd.f32 %v399, %v400
        %v405 = vadd.f32 %v404, %v401
        %v406 = vadd.f32 %v405, %v402
        %407 = vadd.xlane.f32.xlu0 %v406
        %v408 = vpop.xlane.xlu0 %407
        %v409 = vadd.f32 %v403, %v408
        %vm410 = vcmask 7168
        %411 = vst.msk [vmem:[#allocation2] sm:$0xff] %vm410, %v409
        %v412 = vld [vmem:[#allocation3] sm:$0xff]
        %v413 = vmul.f32 %v399, %v399
        %v414 = vmul.f32 %v400, %v400
        %v415 = vmul.f32 %v401, %v401
        %v416 = vmul.f32 %v402, %v402
        %v417 = vadd.f32 %v413, %v414
        %v418 = vadd.f32 %v417, %v415
        %v419 = vadd.f32 %v418, %v416
        %420 = vadd.xlane.f32.xlu0 %v419
        %v421 = vpop.xlane.xlu0 %420
        %v422 = vadd.f32 %v412, %v421
        %423 = vst.msk [vmem:[#allocation3] sm:$0xff] %vm410, %v422
        %p424 = scmp.eq.s32.totalorder %s18, 1
        // Predicated region
        $region45: #{tpu_custom_call.1} parent=35 // pred_check
          %p425 = pneg %p424
        $region46: #{tpu_custom_call.1} parent=35 // pred_check_branch
          %427 = sbr.rel (%p425) target = $region48
        $region47: #{tpu_custom_call.1} parent=35 // pred_region
          %v428 = vld [vmem:[#allocation2] sm:$0xff]
          %v429 = vmul.f32 %v428, 0.0015432099
          %v430 = vld [vmem:[#allocation3] sm:$0xff]
          %v431 = vmul.f32 %v430, 0.0015432099
          %v432 = vmul.f32 %v429, %v429
          %v433 = vsub.f32 %v431, %v432
          %v434 = vmax.f32 %v433, 0.0
          %v435 = vld [vmem:[%s2] sm:$0xff]
          %v436 = vadd.f32 %v434, 1e-05
          %v437 = vrsqrt.pop %v436
          %v438 = vmul.f32 %v435, %v437
          %v439 = vld [vmem:[%s3] sm:$0xff]
          %v440 = vmul.f32 %v438, %v429
          %v441 = vsub.f32 %v439, %v440
          %442 = vst.msk [vmem:[%s4] sm:$0xff] %vm410, %v438
          %444 = vrot.lane.b32.xlu0 %v441, 1
          %v445 = vpop.permute.xlu0 %444
          %vm447 = vcmask 15368
          %448 = vst.msk [vmem:[%s4] sm:$0xff] %vm447, %v445
        $region48: #{tpu_custom_call.1} parent=35 // pred_fallthru
          _
        // Predicated region
        $region49: #{tpu_custom_call.1} parent=35 // pred_check
          %p449 = pneg %p120
        $region50: #{tpu_custom_call.1} parent=35 // pred_check_branch
          %451 = sbr.rel (%p449) target = $region52
        $region51: #{tpu_custom_call.1} parent=35 // pred_region
          _
        $region52: #{tpu_custom_call.1} parent=35 // pred_fallthru
          _
        // Predicated region
        $region53: #{tpu_custom_call.1} parent=35 // pred_check
          %p452 = pneg %p120
        $region54: #{tpu_custom_call.1} parent=35 // pred_check_branch
          %454 = sbr.rel (%p452) target = $region56
        $region55: #{tpu_custom_call.1} parent=35 // pred_region
          _
        $region56: #{tpu_custom_call.1} parent=35 // pred_fallthru
          _
      $region36: #{tpu_custom_call.1} parent=5 // pred_fallthru
        _
      %p455 = scmp.le.s32.totalorder 2, %s13
      // Predicated region
      $region57: #{tpu_custom_call.1} parent=5 // pred_check
        %p456 = pneg %p455
      $region58: #{tpu_custom_call.1} parent=5 // pred_check_branch
        %458 = sbr.rel (%p456) target = $region60
      $region59: #{tpu_custom_call.1} parent=5 // pred_region
        %s459 = ssub.s32 %s13, 2
      $region60: #{tpu_custom_call.1} parent=5 // pred_fallthru
        _
    $region6: #{tpu_custom_call.1} parent=1 // loop_footer
      %s17 = sadd.s32 1, %s13
    $region7: #{tpu_custom_call.1} parent=1 // loop_footer_branch
      %12 = sbr.rel target = $region3
    $region8: #{tpu_custom_call.1} parent=1 // loop_exit
      _
    %460 = vsyncpa [#allocation5], 1
    %s461 = scalar_lea.sflag [#allocation5], 1
    %462 = vsyncpa %s461, 1

</llo_original>
